<compile_context>
chip_gen: v7x
topology: tpu7x:2x2x1
jax: 0.10.0
libtpu: 0.0.40
codegen_flags: <defaults>
</compile_context>

<pallas_src>
import math

import jax
import jax.numpy as jnp
from jax import lax
from jax.experimental import pallas as pl
from jax.experimental.pallas import tpu as pltpu

_EPS = 1e-5
_MASK_NEG = -1e30          # large-negative fill folded into the pair bias


def _layer_norm_no_affine(x):
    mu = jnp.mean(x, axis=-1, keepdims=True)
    var = jnp.mean((x - mu) ** 2, axis=-1, keepdims=True)
    return (x - mu) * lax.rsqrt(var + _EPS)


def _pick_tile(L, cap):
    cap = int(cap)
    if cap >= L:
        return L
    cap = max(8, cap - cap % 8)
    for t in range(cap, 7, -8):       # multiples of 8 that divide L
        if L % t == 0:
            return t
    return L


def _clamp_vmem(nbytes):
    return int(min(max(nbytes, 32 << 20), 48 << 20))


# --------------------------------------------------------------------------
# Kernel 1: masked pair bias
#   bias[b, h, q, k] = mask[k] ? LN(pair)[b, q, k, :] . wp[:, h] : -1e30
# --------------------------------------------------------------------------
def _make_bias_kernel(H, TI, L, C):
    def kernel(pair_ref, mask_ref, wpt_ref, bp_ref, bias_ref):
        x = pair_ref[0].astype(jnp.float32)                    # (TI, L, C)
        xn = _layer_norm_no_affine(x).reshape(TI * L, C)
        # all heads with one MXU matmul: (H, C) x (TI*L, C)^T -> (H, TI*L)
        b = lax.dot_general(wpt_ref[...], xn,
                            (((1,), (1,)), ((), ())),
                            preferred_element_type=jnp.float32)
        b = (b + bp_ref[...]).reshape(H, TI, L)                 # (H, TI, L)
        keep = mask_ref[...] > 0.5                              # (1, 1, L)
        bias_ref[0] = jnp.where(keep, b, _MASK_NEG)

    return kernel


# --------------------------------------------------------------------------
# Kernel 2: row-tiled biased, masked, gated multi-head attention
# --------------------------------------------------------------------------
def _make_attn_kernel(H, d, TR, L, C):
    def kernel(pair_ref, bias_ref, wqkvg_ref, bqkvg_ref, wo_ref, bo_ref,
               out_ref):
        x = pair_ref[0].astype(jnp.float32)                     # (TR, L, C)
        xn = _layer_norm_no_affine(x).reshape(TR * L, C).astype(jnp.bfloat16)

        # Fused q/k/v/gate projection: one (TR*L, C) x (C, 4C) MXU matmul.
        proj = jnp.dot(xn, wqkvg_ref[...],
                       preferred_element_type=jnp.float32) + bqkvg_ref[...]
        q = proj[:, 0 * C:1 * C].reshape(TR, L, C).astype(jnp.bfloat16)
        k = proj[:, 1 * C:2 * C].reshape(TR, L, C).astype(jnp.bfloat16)
        v = proj[:, 2 * C:3 * C].reshape(TR, L, C).astype(jnp.bfloat16)
        gate = jax.nn.sigmoid(proj[:, 3 * C:4 * C]).reshape(TR, L, C)

        bias_all = bias_ref[0]                                  # (H, L, L) f32

        head_outs = []
        for h in range(H):
            sl = slice(h * d, (h + 1) * d)
            logits = jnp.einsum('rqd,rkd->rqk', q[:, :, sl], k[:, :, sl],
                                preferred_element_type=jnp.float32)
            logits = logits + bias_all[h][None]                 # mask folded in
            m = jnp.max(logits, axis=-1, keepdims=True)
            p = jnp.exp(logits - m)
            denom = jnp.sum(p, axis=-1, keepdims=True)
            w = p * pl.reciprocal(denom, approx=True)
            head_outs.append(
                jnp.einsum('rqk,rkd->rqd',
                           w.astype(jnp.bfloat16), v[:, :, sl],
                           preferred_element_type=jnp.float32))

        wavg = jnp.concatenate(head_outs, axis=-1)              # (TR, L, C)
        gated = (wavg * gate).astype(jnp.bfloat16)
        out = jnp.dot(gated.reshape(TR * L, C), wo_ref[...],
                      preferred_element_type=jnp.float32) + bo_ref[...]
        out_ref[0] = out.reshape(TR, L, C).astype(out_ref.dtype)

    return kernel


# --------------------------------------------------------------------------
# Wrapper
# --------------------------------------------------------------------------
def triangle_attention(pair_act, seq_mask, params, num_head,
                       orientation="per_row"):
    assert orientation in ("per_row", "per_column")
    if orientation == "per_column":
        pair_act = jnp.swapaxes(pair_act, 1, 2)

    B, L, L2, C = pair_act.shape
    assert L == L2
    H = num_head
    assert C % H == 0
    d = C // H
    f32, bf16 = jnp.float32, jnp.bfloat16

    gamma = params["gamma"].astype(f32)
    beta = params["beta"].astype(f32)
    scale = d ** -0.5

    # Fold the LayerNorm affine (and the q scale) into the projections:
    #   (xn*gamma + beta) @ W == xn @ (gamma[:,None]*W) + beta @ W
    def fold_w(w, s=1.0):
        return (gamma[:, None] * w.astype(f32)) * s

    def fold_b(w, s=1.0, extra=None):
        b = (beta @ w.astype(f32)) * s
        if extra is not None:
            b = b + extra.astype(f32)
        return b

    # Fused q/k/v/gate projection weights: (C, 4C) bf16 + (1, 4C) f32 bias.
    w_qkvg = jnp.concatenate(
        [fold_w(params["wq"], scale), fold_w(params["wk"]),
         fold_w(params["wv"]), fold_w(params["wg"])], axis=1).astype(bf16)
    b_qkvg = jnp.concatenate(
        [fold_b(params["wq"], scale), fold_b(params["wk"]),
         fold_b(params["wv"]), fold_b(params["wg"], extra=params["bg"])],
        axis=0).reshape(1, 4 * C).astype(f32)

    wo = params["wo"].astype(bf16)
    bo = params["bo"].astype(f32).reshape(1, C)
    wpt = fold_w(params["wp"]).T                                # (H, C) f32
    bp = fold_b(params["wp"]).reshape(H, 1)

    mask3 = seq_mask.reshape(B, 1, L).astype(f32)

    # Tile sizes, kept within a ~36 MiB working-set budget.
    budget = 36 << 20
    TI = _pick_tile(L, min(128, max(8, budget // (4 * L * (6 * C + 2 * H)))))
    attn_fixed = 8 * H * L * L
    TR = _pick_tile(L, min(64, max(8, (budget - attn_fixed)
                                   // (4 * L * (12 * C + 4 * L)))))

    # ---- kernel 1: masked pair bias (B, H, L, L) --------------------------
    bias_vmem = 4 * TI * L * (6 * C + 2 * H) + (1 << 20)
    bias = pl.pallas_call(
        _make_bias_kernel(H, TI, L, C),
        out_shape=jax.ShapeDtypeStruct((B, H, L, L), f32),
        grid_spec=pltpu.PrefetchScalarGridSpec(
            num_scalar_prefetch=0,
            grid=(B, L // TI),
            in_specs=[
                pl.BlockSpec((1, TI, L, C), lambda b, i: (b, i, 0, 0)),
                pl.BlockSpec((1, 1, L), lambda b, i: (b, 0, 0)),
                pl.BlockSpec((H, C), lambda b, i: (0, 0)),
                pl.BlockSpec((H, 1), lambda b, i: (0, 0)),
            ],
            out_specs=pl.BlockSpec((1, H, TI, L), lambda b, i: (b, 0, i, 0)),
        ),
        compiler_params=pltpu.CompilerParams(
            dimension_semantics=("parallel", "parallel"),
            vmem_limit_bytes=_clamp_vmem(bias_vmem)),
    )(pair_act, mask3, wpt, bp)

    # ---- kernel 2: row-tiled attention ------------------------------------
    wmap = lambda b, r: (0, 0)
    attn_vmem = 4 * TR * L * (12 * C + 4 * L) + attn_fixed + (2 << 20)
    out = pl.pallas_call(
        _make_attn_kernel(H, d, TR, L, C),
        out_shape=jax.ShapeDtypeStruct((B, L, L, C), pair_act.dtype),
        grid_spec=pltpu.PrefetchScalarGridSpec(
            num_scalar_prefetch=0,
            grid=(B, L // TR),
            in_specs=[
                pl.BlockSpec((1, TR, L, C), lambda b, r: (b, r, 0, 0)),
                pl.BlockSpec((1, H, L, L), lambda b, r: (b, 0, 0, 0)),
                pl.BlockSpec((C, 4 * C), wmap), pl.BlockSpec((1, 4 * C), wmap),
                pl.BlockSpec((C, C), wmap), pl.BlockSpec((1, C), wmap),
            ],
            out_specs=pl.BlockSpec((1, TR, L, C), lambda b, r: (b, r, 0, 0)),
        ),
        compiler_params=pltpu.CompilerParams(
            dimension_semantics=("parallel", "parallel"),
            vmem_limit_bytes=_clamp_vmem(attn_vmem)),
    )(pair_act, bias, w_qkvg, b_qkvg, wo, bo)

    if orientation == "per_column":
        out = jnp.swapaxes(out, 1, 2)
    return out


# --------------------------------------------------------------------------
# Pure-JAX mirror of the PyTorch TriangleAttention forward (for validation)
# --------------------------------------------------------------------------
def reference(pair_act, seq_mask, p, num_head, orientation="per_row"):
    eps = 1e-5
    if orientation == "per_column":
        pair_act = jnp.swapaxes(pair_act, 1, 2)
    B, L, _, C = pair_act.shape
    d = C // num_head

    mu = jnp.mean(pair_act, -1, keepdims=True)
    var = jnp.mean((pair_act - mu) ** 2, -1, keepdims=True)
    xn = (pair_act - mu) / jnp.sqrt(var + eps) * p["gamma"] + p["beta"]

    bias = jnp.einsum("bqkc,ch->bhqk", xn, p["wp"])            # (B,H,L,L)

    q = xn @ p["wq"]
    k = xn @ p["wk"]
    v = xn @ p["wv"]

    def split(t):
        return t.reshape(B, L, L, num_head, d).transpose(0, 1, 3, 2, 4)

    qh = split(q) * d ** -0.5
    kh = split(k)
    vh = split(v)

    logits = jnp.einsum("bihqd,bihkd->bihqk", qh, kh) + bias[:, None]
    keep = seq_mask[:, None, None, None, :] > 0.5
    logits = jnp.where(keep, logits, jnp.finfo(jnp.float32).min)
    w = jax.nn.softmax(logits, axis=-1)
    o = jnp.einsum("bihqk,bihkd->bihqd", w, vh)
    o = o.transpose(0, 1, 3, 2, 4).reshape(B, L, L, C)

    gate = jax.nn.sigmoid(xn @ p["wg"] + p["bg"])
    out = (o * gate) @ p["wo"] + p["bo"]
    if orientation == "per_column":
        out = jnp.swapaxes(out, 1, 2)
    return out


if __name__ == "__main__":
    B, L, C, H = 2, 16, 32, 4

    key = jax.random.PRNGKey(0)
    ks = jax.random.split(key, 12)
    f32 = jnp.float32

    params = {
        # LayerNorm (non-trivial affine so the weight folding is exercised)
        "gamma": 1.0 + 0.1 * jax.random.normal(ks[0], (C,), f32),
        "beta": 0.1 * jax.random.normal(ks[1], (C,), f32),
        # pair -> per-head bias projection (no bias)
        "wp": jax.random.normal(ks[2], (C, H), f32) / math.sqrt(C),
        # attention projections (no bias for q/k/v)
        "wq": jax.random.normal(ks[3], (C, C), f32) / math.sqrt(C),
        "wk": jax.random.normal(ks[4], (C, C), f32) / math.sqrt(C),
        "wv": jax.random.normal(ks[5], (C, C), f32) / math.sqrt(C),
        # gate linear (synthetic deterministic init instead of zeros/ones)
        "wg": 0.1 * jax.random.normal(ks[6], (C, C), f32),
        "bg": jnp.ones((C,), f32),
        # output projection
        "wo": jax.random.normal(ks[7], (C, C), f32) / math.sqrt(C),
        "bo": 0.1 * jax.random.normal(ks[8], (C,), f32),
    }

    pair_act = jax.random.normal(ks[9], (B, L, L, C), f32)
    # deterministic padding mask: last 4 keys are padding
    seq_mask = jnp.concatenate(
        [jnp.ones((B, L - 4), f32), jnp.zeros((B, 4), f32)], axis=-1)

    for orientation in ("per_row", "per_column"):
        out = triangle_attention(pair_act, seq_mask, params, H,
                                 orientation=orientation)
        out = jax.block_until_ready(out)
        ref = jax.block_until_ready(
            reference(pair_act, seq_mask, params, H, orientation=orientation))
        assert out.shape == (B, L, L, C)
        # bf16 MXU operands (vs. the pure-f32 reference) introduce ~1e-2
        # level absolute noise; 1e-1 is a safe correctness gate.
        max_err = float(jnp.max(jnp.abs(out - ref)))
        assert max_err < 1e-1, f"{orientation}: max abs error {max_err}"

    print("KERNEL_OK")
</pallas_src>

<mosaic_0001>
module attributes {stable_mosaic.version = 11 : i64} {
  func.func @kernel(%arg0: i32, %arg1: i32, %arg2: memref<1x16x16x32xf32, #tpu.memory_space<vmem>>, %arg3: memref<1x1x16xf32, #tpu.memory_space<vmem>>, %arg4: memref<4x32xf32, #tpu.memory_space<vmem>>, %arg5: memref<4x1xf32, #tpu.memory_space<vmem>>, %arg6: memref<1x4x16x16xf32, #tpu.memory_space<vmem>>) attributes {dimension_semantics = [#tpu.dimension_semantics<parallel>, #tpu.dimension_semantics<parallel>], iteration_bounds = array<i64: 2, 1>, scalar_prefetch = 0 : i64, scratch_operands = 0 : i64, tpu.core_type = #tpu.core_type<tc>, window_params = [{transform_indices = @transform_0, window_bounds = array<i64: 1, 16, 16, 32>}, {transform_indices = @transform_1, window_bounds = array<i64: 1, 1, 16>}, {pipeline_mode = #tpu.pipeline_mode<synchronous>, transform_indices = @transform_2, window_bounds = array<i64: 4, 32>}, {pipeline_mode = #tpu.pipeline_mode<synchronous>, transform_indices = @transform_3, window_bounds = array<i64: 4, 1>}, {transform_indices = @transform_4, window_bounds = array<i64: 1, 4, 16, 16>}]} {
    %c0 = arith.constant 0 : index
    %c0_0 = arith.constant 0 : index
    %c0_1 = arith.constant 0 : index
    %c0_2 = arith.constant 0 : index
    %0 = vector.load %arg2[%c0, %c0_0, %c0_1, %c0_2] : memref<1x16x16x32xf32, #tpu.memory_space<vmem>>, vector<1x16x16x32xf32>
    %1 = vector.shape_cast %0 : vector<1x16x16x32xf32> to vector<16x16x32xf32>
    %cst = arith.constant dense<0.000000e+00> : vector<16x16xf32>
    %2 = vector.multi_reduction <add>, %1, %cst [2] : vector<16x16x32xf32> to vector<16x16xf32>
    %3 = vector.shape_cast %2 : vector<16x16xf32> to vector<16x16x1xf32>
    %cst_3 = arith.constant 3.200000e+01 : f32
    %4 = vector.broadcast %cst_3 : f32 to vector<16x16x1xf32>
    %5 = arith.divf %3, %4 : vector<16x16x1xf32>
    %6 = vector.broadcast %5 : vector<16x16x1xf32> to vector<16x16x32xf32>
    %7 = arith.subf %1, %6 : vector<16x16x32xf32>
    %8 = arith.mulf %7, %7 : vector<16x16x32xf32>
    %cst_4 = arith.constant dense<0.000000e+00> : vector<16x16xf32>
    %9 = vector.multi_reduction <add>, %8, %cst_4 [2] : vector<16x16x32xf32> to vector<16x16xf32>
    %10 = vector.shape_cast %9 : vector<16x16xf32> to vector<16x16x1xf32>
    %cst_5 = arith.constant 3.200000e+01 : f32
    %11 = vector.broadcast %cst_5 : f32 to vector<16x16x1xf32>
    %12 = arith.divf %10, %11 : vector<16x16x1xf32>
    %13 = vector.broadcast %5 : vector<16x16x1xf32> to vector<16x16x32xf32>
    %14 = arith.subf %1, %13 : vector<16x16x32xf32>
    %cst_6 = arith.constant 9.99999974E-6 : f32
    %15 = vector.broadcast %cst_6 : f32 to vector<16x16x1xf32>
    %16 = arith.addf %12, %15 : vector<16x16x1xf32>
    %17 = math.rsqrt %16 : vector<16x16x1xf32>
    %18 = vector.broadcast %17 : vector<16x16x1xf32> to vector<16x16x32xf32>
    %19 = arith.mulf %14, %18 : vector<16x16x32xf32>
    %20 = vector.shape_cast %19 : vector<16x16x32xf32> to vector<256x32xf32>
    %c0_7 = arith.constant 0 : index
    %c0_8 = arith.constant 0 : index
    %21 = vector.load %arg4[%c0_7, %c0_8] : memref<4x32xf32, #tpu.memory_space<vmem>>, vector<4x32xf32>
    %cst_9 = arith.constant dense<0.000000e+00> : vector<4x256xf32>
    %22 = tpu.matmul %21, %20, %cst_9 {dimension_numbers = #tpu.dot_dimension_numbers<[1], [1], [0], [0], [0, 0, 1, 0], [], []>} : vector<4x32xf32>, vector<256x32xf32>, vector<4x256xf32> -> vector<4x256xf32>
    %c0_10 = arith.constant 0 : index
    %c0_11 = arith.constant 0 : index
    %23 = vector.load %arg5[%c0_10, %c0_11] : memref<4x1xf32, #tpu.memory_space<vmem>>, vector<4x1xf32>
    %24 = vector.broadcast %23 : vector<4x1xf32> to vector<4x256xf32>
    %25 = arith.addf %22, %24 : vector<4x256xf32>
    %26 = vector.shape_cast %25 : vector<4x256xf32> to vector<4x16x16xf32>
    %c0_12 = arith.constant 0 : index
    %c0_13 = arith.constant 0 : index
    %c0_14 = arith.constant 0 : index
    %27 = vector.load %arg3[%c0_12, %c0_13, %c0_14] : memref<1x1x16xf32, #tpu.memory_space<vmem>>, vector<1x1x16xf32>
    %cst_15 = arith.constant 5.000000e-01 : f32
    %28 = vector.broadcast %cst_15 : f32 to vector<1x1x16xf32>
    %29 = arith.cmpf ogt, %27, %28 : vector<1x1x16xf32>
    %cst_16 = arith.constant -1.000000e+30 : f32
    %30 = vector.shape_cast %29 : vector<1x1x16xi1> to vector<1x1x16xi1>
    %31 = vector.broadcast %30 : vector<1x1x16xi1> to vector<4x16x16xi1>
    %32 = vector.broadcast %cst_16 : f32 to vector<4x16x16xf32>
    %33 = arith.select %31, %26, %32 : vector<4x16x16xi1>, vector<4x16x16xf32>
    %c0_17 = arith.constant 0 : index
    %c0_18 = arith.constant 0 : index
    %c0_19 = arith.constant 0 : index
    %c0_20 = arith.constant 0 : index
    %34 = vector.load %arg6[%c0_17, %c0_18, %c0_19, %c0_20] : memref<1x4x16x16xf32, #tpu.memory_space<vmem>>, vector<1x4x16x16xf32>
    %35 = vector.shape_cast %34 : vector<1x4x16x16xf32> to vector<4x16x16xf32>
    %36 = vector.shape_cast %33 : vector<4x16x16xf32> to vector<1x4x16x16xf32>
    tpu.vector_store %arg6[%c0_17, %c0_18, %c0_19, %c0_20], %36 {strides = array<i32>} : memref<1x4x16x16xf32, #tpu.memory_space<vmem>>, vector<1x4x16x16xf32>,
    return
  }
  func.func @transform_0(%arg0: i32, %arg1: i32) -> (i32, i32, i32, i32) {
    %c0_i32 = arith.constant 0 : i32
    %c0_i32_0 = arith.constant 0 : i32
    %c0_i32_1 = arith.constant 0 : i32
    return %arg0, %arg1, %c0_i32, %c0_i32_0 : i32, i32, i32, i32
  }
  func.func @transform_1(%arg0: i32, %arg1: i32) -> (i32, i32, i32) {
    %c0_i32 = arith.constant 0 : i32
    %c0_i32_0 = arith.constant 0 : i32
    %c0_i32_1 = arith.constant 0 : i32
    return %arg0, %c0_i32, %c0_i32_0 : i32, i32, i32
  }
  func.func @transform_2(%arg0: i32, %arg1: i32) -> (i32, i32) {
    %c0_i32 = arith.constant 0 : i32
    %c0_i32_0 = arith.constant 0 : i32
    %c0_i32_1 = arith.constant 0 : i32
    return %c0_i32, %c0_i32_0 : i32, i32
  }
  func.func @transform_3(%arg0: i32, %arg1: i32) -> (i32, i32) {
    %c0_i32 = arith.constant 0 : i32
    %c0_i32_0 = arith.constant 0 : i32
    %c0_i32_1 = arith.constant 0 : i32
    return %c0_i32, %c0_i32_0 : i32, i32
  }
  func.func @transform_4(%arg0: i32, %arg1: i32) -> (i32, i32, i32, i32) {
    %c0_i32 = arith.constant 0 : i32
    %c0_i32_0 = arith.constant 0 : i32
    %c0_i32_1 = arith.constant 0 : i32
    return %arg0, %c0_i32, %arg1, %c0_i32_0 : i32, i32, i32, i32
  }
}

</mosaic_0001>

<llo_original>
// kernel: tpu_custom_call.1
$region0: #{tpu_custom_call.1}
  #allocation0 [shape = 'u32[]', space=smem, size = 0x4, offset = 0x4, fixed_abs, tag = 'smem constant byte address 0x4 - core index']
  #allocation1 [shape = 'u32[144,128]{1,0:T(1,128)}', space=vmem, size = 0x12000, scoped, tag = 'internal scratch']
  %s0 = inlined_call_operand.hbm [shape: f32[2,16,16,32], index: 0, kind: input, shape index: {}]
  %s1 = inlined_call_operand.vmem [shape: f32[2,1,16], index: 1, kind: input, shape index: {}]
  %s2 = inlined_call_operand.vmem [shape: f32[4,32], index: 2, kind: input, shape index: {}]
  %s3 = inlined_call_operand.vmem [shape: f32[4,1], index: 3, kind: input, shape index: {}]
  %s4 = inlined_call_operand.hbm [shape: f32[2,4,16,16], index: 4, kind: output, shape index: {}]
  %s5 = sld [smem:[#allocation0]]
  $region53: #{tpu_custom_call.1} parent=0
    _
  %s7 = ssub.s32 1, %s5
  %s8 = scalar_select 0, %s7, %s5
  $region1: #{tpu_custom_call.1} parent=0
    #allocation2 [shape = 'u8[262144]{0}', space=vmem, size = 0x40000, scoped, tag = 'input window, operand 0']
    #allocation3 [shape = 's32[2]{0}', space=sflag, size = 0x8, scoped, tag = 'scoped memory for tpu_custom_call.1']
    #allocation4 [shape = 's32[2]{0}', space=sflag, size = 0x8, scoped, tag = 'scoped memory for tpu_custom_call.1']
    #allocation5 [shape = 'u8[65536]{0}', space=vmem, size = 0x10000, scoped, tag = 'output window, operand 0']
    %9 = vsyncpa [#allocation3], 0
    %s10 = scalar_lea.sflag [#allocation3], 1
    %11 = vsyncpa %s10, 0
    %12 = vsyncpa [#allocation4], 0
    %s13 = scalar_lea.sflag [#allocation4], 1
    %14 = vsyncpa %s13, 0
    loop: start=0, step=1, limit=4
    $region2: #{tpu_custom_call.1} parent=1 // loop_pre_header
      _
    $region3: #{tpu_custom_call.1} parent=1 // loop_header
      %s16 = sphi 0, %s20
      %p17 = scmp.ge.s32.totalorder %s16, 4
      %s23 = sphi 0, %s35
      %s24 = sphi 0, %s31
      %s25 = sphi 0, %s23
      %s26 = sphi 0, %s24
      %s27 = sphi 0, %s25
      %s28 = sphi 0, %s26
      %s40 = sphi 0, %s42
      %s43 = sphi 0, %s40
      %s44 = sphi 0, %s43
      %s60 = sphi 0, %s44
      %s66 = sphi 0, %s68
      %s69 = sphi 0, %s66
      %s70 = sphi 0, %s69
      %s86 = sphi 0, %s70
      %s90 = sphi 0, %s90
      %s92 = sphi 0, %s90
      %s93 = sphi 0, %s92
      %s107 = sphi 0, %s93
      %s111 = sphi 0, %s111
      %s113 = sphi 0, %s111
      %s114 = sphi 0, %s113
      %s128 = sphi 0, %s114
      %s136 = sphi 0, %s138
      %s139 = sphi 0, %s136
      %s140 = sphi 0, %s139
      %s156 = sphi 0, %s140
    $region4: #{tpu_custom_call.1} parent=1 // loop_header_branch
      %19 = sbr.rel (%p17) target = $region8
    $region5: #{tpu_custom_call.1} parent=1 // loop_body
      %s21 = ssub.s32 %s16, 1
      %s22 = ssub.s32 %s16, 2
      %s29 = sadd.s32 1, %s24
      %p30 = scmp.ge.s32.totalorder %s29, 1
      %s31 = scalar_select %p30, 0, %s29
      %s32 = sadd.s32 1, %s23
      %s33 = scalar_select %p30, %s32, %s23
      %p34 = scmp.ge.s32.totalorder %s33, 2
      %s35 = scalar_select %p34, 0, %s33
      %s36 = ssub.s32 %s23, %s35
      %s37 = ssub.s32 %s24, %s31
      %s38 = sor.u32 %s36, %s37
      %p39 = scmp.eq.s32.totalorder %s38, 0
      %s41 = sadd.s32 %s40, 1
      %s42 = scalar_select %p39, %s40, %s41
      %p45 = pneg %p39
      %p46 = scmp.eq.s32.totalorder %s16, 1
      %p47 = por %p45, %p46
      %p48 = scmp.ne.s32.totalorder %s40, %s43
      %p49 = scmp.eq.s32.totalorder %s16, 0
      %p50 = por %p48, %p49
      %p51 = scmp.ne.s32.totalorder %s40, %s43
      %p52 = scmp.eq.s32.totalorder %s21, 1
      %p53 = por %p51, %p52
      %p54 = scmp.ne.s32.totalorder %s43, %s44
      %p55 = scmp.eq.s32.totalorder %s21, 0
      %p56 = por %p54, %p55
      %p57 = scmp.ne.s32.totalorder %s43, %s44
      %p58 = scmp.eq.s32.totalorder %s22, 1
      %p59 = por %p57, %p58
      %p61 = scmp.ne.s32.totalorder %s44, %s60
      %p62 = scmp.eq.s32.totalorder %s22, 0
      %p63 = por %p61, %p62
      %s64 = ssub.s32 %s23, %s35
      %p65 = scmp.eq.s32.totalorder %s64, 0
      %s67 = sadd.s32 %s66, 1
      %s68 = scalar_select %p65, %s66, %s67
      %p71 = pneg %p65
      %p72 = scmp.eq.s32.totalorder %s16, 1
      %p73 = por %p71, %p72
      %p74 = scmp.ne.s32.totalorder %s66, %s69
      %p75 = scmp.eq.s32.totalorder %s16, 0
      %p76 = por %p74, %p75
      %p77 = scmp.ne.s32.totalorder %s66, %s69
      %p78 = scmp.eq.s32.totalorder %s21, 1
      %p79 = por %p77, %p78
      %p80 = scmp.ne.s32.totalorder %s69, %s70
      %p81 = scmp.eq.s32.totalorder %s21, 0
      %p82 = por %p80, %p81
      %p83 = scmp.ne.s32.totalorder %s69, %s70
      %p84 = scmp.eq.s32.totalorder %s22, 1
      %p85 = por %p83, %p84
      %p87 = scmp.ne.s32.totalorder %s70, %s86
      %p88 = scmp.eq.s32.totalorder %s22, 0
      %p89 = por %p87, %p88
      %s91 = sadd.s32 %s90, 1
      %p94 = scmp.eq.s32.totalorder %s16, 1
      %p95 = scmp.ne.s32.totalorder %s90, %s92
      %p96 = scmp.eq.s32.totalorder %s16, 0
      %p97 = por %p95, %p96
      %p98 = scmp.ne.s32.totalorder %s90, %s92
      %p99 = scmp.eq.s32.totalorder %s21, 1
      %p100 = por %p98, %p99
      %p101 = scmp.ne.s32.totalorder %s92, %s93
      %p102 = scmp.eq.s32.totalorder %s21, 0
      %p103 = por %p101, %p102
      %p104 = scmp.ne.s32.totalorder %s92, %s93
      %p105 = scmp.eq.s32.totalorder %s22, 1
      %p106 = por %p104, %p105
      %p108 = scmp.ne.s32.totalorder %s93, %s107
      %p109 = scmp.eq.s32.totalorder %s22, 0
      %p110 = por %p108, %p109
      %s112 = sadd.s32 %s111, 1
      %p115 = scmp.eq.s32.totalorder %s16, 1
      %p116 = scmp.ne.s32.totalorder %s111, %s113
      %p117 = scmp.eq.s32.totalorder %s16, 0
      %p118 = por %p116, %p117
      %p119 = scmp.ne.s32.totalorder %s111, %s113
      %p120 = scmp.eq.s32.totalorder %s21, 1
      %p121 = por %p119, %p120
      %p122 = scmp.ne.s32.totalorder %s113, %s114
      %p123 = scmp.eq.s32.totalorder %s21, 0
      %p124 = por %p122, %p123
      %p125 = scmp.ne.s32.totalorder %s113, %s114
      %p126 = scmp.eq.s32.totalorder %s22, 1
      %p127 = por %p125, %p126
      %p129 = scmp.ne.s32.totalorder %s114, %s128
      %p130 = scmp.eq.s32.totalorder %s22, 0
      %p131 = por %p129, %p130
      %s132 = ssub.s32 %s23, %s35
      %s133 = ssub.s32 %s24, %s31
      %s134 = sor.u32 %s132, %s133
      %p135 = scmp.eq.s32.totalorder %s134, 0
      %s137 = sadd.s32 %s136, 1
      %s138 = scalar_select %p135, %s136, %s137
      %p141 = pneg %p135
      %p142 = scmp.eq.s32.totalorder %s16, 1
      %p143 = por %p141, %p142
      %p144 = scmp.ne.s32.totalorder %s136, %s139
      %p145 = scmp.eq.s32.totalorder %s16, 0
      %p146 = por %p144, %p145
      %p147 = scmp.ne.s32.totalorder %s136, %s139
      %p148 = scmp.eq.s32.totalorder %s21, 1
      %p149 = por %p147, %p148
      %p150 = scmp.ne.s32.totalorder %s139, %s140
      %p151 = scmp.eq.s32.totalorder %s21, 0
      %p152 = por %p150, %p151
      %p153 = scmp.ne.s32.totalorder %s139, %s140
      %p154 = scmp.eq.s32.totalorder %s22, 1
      %p155 = por %p153, %p154
      %p157 = scmp.ne.s32.totalorder %s140, %s156
      %p158 = scmp.eq.s32.totalorder %s22, 0
      %p159 = por %p157, %p158
      %p160 = scmp.le.s32.totalorder 1, %s16
      %p161 = scmp.lt.s32.totalorder %s16, 3
      %p162 = pnand %p160, %p161
      %p163 = pneg %p162
      // Predicated region
      $region9: #{tpu_custom_call.1} parent=5 // pred_check
        _
      $region10: #{tpu_custom_call.1} parent=5 // pred_check_branch
        %165 = sbr.rel (%p162) target = $region12
      $region11: #{tpu_custom_call.1} parent=5 // pred_region
        %s166 = ssub.s32 %s16, 1
        // Predicated region
        $region13: #{tpu_custom_call.1} parent=11 // pred_check
          %p167 = pneg %p103
        $region14: #{tpu_custom_call.1} parent=11 // pred_check_branch
          %169 = sbr.rel (%p167) target = $region16
        $region15: #{tpu_custom_call.1} parent=11 // pred_region
          _
        $region16: #{tpu_custom_call.1} parent=11 // pred_fallthru
          _
        // Predicated region
        $region17: #{tpu_custom_call.1} parent=11 // pred_check
          %p170 = pneg %p124
        $region18: #{tpu_custom_call.1} parent=11 // pred_check_branch
          %172 = sbr.rel (%p170) target = $region20
        $region19: #{tpu_custom_call.1} parent=11 // pred_region
          _
        $region20: #{tpu_custom_call.1} parent=11 // pred_fallthru
          _
      $region12: #{tpu_custom_call.1} parent=5 // pred_fallthru
        _
      %p173 = scmp.lt.s32.totalorder %s16, 2
      // Predicated region
      $region21: #{tpu_custom_call.1} parent=5 // pred_check
        %p174 = pneg %p173
      $region22: #{tpu_custom_call.1} parent=5 // pred_check_branch
        %176 = sbr.rel (%p174) target = $region24
      $region23: #{tpu_custom_call.1} parent=5 // pred_region
        // Predicated region
        $region25: #{tpu_custom_call.1} parent=23 // pred_check
          %p177 = pneg %p50
        $region26: #{tpu_custom_call.1} parent=23 // pred_check_branch
          %179 = sbr.rel (%p177) target = $region28
        $region27: #{tpu_custom_call.1} parent=23 // pred_region
          %s180 = sand.u32 %s40, 1
          %s181 = scalar_lea.sflag [#allocation3], %s180
          %s182 = sand.u32 %s40, 1
          %s183 = smul.addr %s182, 256
          %s184 = scalar_lea.vmem [#allocation2], %s183
          %s185 = smul.u32 16, %s24
          %s187 = ssub.s32 4096, 4096
          %188 = vsyncadd %s181, %s187
          %s189 = smul.addr %s185, 2
          %s190 = smul.addr %s23, 32
          %s191 = sadd.s32 %s189, %s190
          %s192 = smul.addr %s191, 128
          %s193 = scalar_lea.hbm %s0, %s192
          %s194 = sshll.u32 %s184, 4
          %s195 = int_to_ptr.vmem [resolvable:$true] %s194
          %200 = dma.hbm_to_vmem [thread:$0]  %s193, 4096, %s195, %s181, 128, 128, 8
        $region28: #{tpu_custom_call.1} parent=23 // pred_fallthru
          _
        // Predicated region
        $region29: #{tpu_custom_call.1} parent=23 // pred_check
          %p201 = pneg %p76
        $region30: #{tpu_custom_call.1} parent=23 // pred_check_branch
          %203 = sbr.rel (%p201) target = $region32
        $region31: #{tpu_custom_call.1} parent=23 // pred_region
          %p204 = scmp.lt.s32.totalorder %s23, 1
          %s205 = scalar_select %p204, %s23, 1
          %s206 = scalar_lea.vmem %s1, %s205
        $region32: #{tpu_custom_call.1} parent=23 // pred_fallthru
          _
      $region24: #{tpu_custom_call.1} parent=5 // pred_fallthru
        _
      %p207 = scmp.le.s32.totalorder 1, %s16
      %p208 = scmp.lt.s32.totalorder %s16, 3
      %p209 = pnand %p207, %p208
      %p210 = pneg %p209
      // Predicated region
      $region33: #{tpu_custom_call.1} parent=5 // pred_check
        _
      $region34: #{tpu_custom_call.1} parent=5 // pred_check_branch
        %212 = sbr.rel (%p209) target = $region36
      $region35: #{tpu_custom_call.1} parent=5 // pred_region
        %s213 = ssub.s32 %s16, 1
        %s214 = sand.u32 %s43, 1
        %s215 = scalar_lea.sflag [#allocation3], %s214
        %s216 = sand.u32 %s43, 1
        %s217 = smul.addr %s216, 256
        %s218 = scalar_lea.vmem [#allocation2], %s217
        // Predicated region
        $region37: #{tpu_custom_call.1} parent=35 // pred_check
          %p219 = pneg %p56
        $region38: #{tpu_custom_call.1} parent=35 // pred_check_branch
          %221 = sbr.rel (%p219) target = $region40
        $region39: #{tpu_custom_call.1} parent=35 // pred_region
          %222 = dma.done %s215, 4096
        $region40: #{tpu_custom_call.1} parent=35 // pred_fallthru
          _
        %s223 = sand.u32 %s43, 1
        %s224 = scalar_lea.sflag [#allocation3], %s223
        %s225 = sand.u32 %s43, 1
        %s226 = smul.addr %s225, 256
        %s227 = scalar_lea.vmem [#allocation2], %s226
        %p228 = pneg %p56
        %p229 = pneg %p53
        %p230 = scmp.lt.s32.totalorder %s25, 1
        %s231 = scalar_select %p230, %s25, 1
        %s232 = scalar_lea.vmem %s1, %s231
        %p233 = pneg %p82
        %p234 = pneg %p79
        %p235 = pneg %p103
        %p236 = pneg %p100
        %p237 = pneg %p124
        %p238 = pneg %p121
        %p239 = pneg %p152
        %p240 = pneg %p149
        %s241 = sand.u32 %s139, 1
        %s242 = scalar_lea.sflag [#allocation4], %s241
        %s243 = sand.u32 %s139, 1
        %s244 = smul.addr %s243, 64
        %s245 = scalar_lea.vmem [#allocation5], %s244
        %s246 = smul.u32 16, %s26
        %p247 = scmp.lt.s32.totalorder %s25, 1
        %s248 = scalar_select %p247, %s25, 1
        %s249 = scalar_lea.vmem %s1, %s248
        %s250 = smul.u32 2, %s26
        %v251 = vld [vmem:[%s218] sm:$0xff]
        %v252 = vld [vmem:[%s218 + $0x8] sm:$0xff]
        %v253 = vld [vmem:[%s218 + $0x10] sm:$0xff]
        %v254 = vld [vmem:[%s218 + $0x18] sm:$0xff]
        %v255 = vld [vmem:[%s218 + $0x20] sm:$0xff]
        %v256 = vld [vmem:[%s218 + $0x28] sm:$0xff]
        %v257 = vld [vmem:[%s218 + $0x30] sm:$0xff]
        %v258 = vld [vmem:[%s218 + $0x38] sm:$0xff]
        %v259 = vld [vmem:[%s218 + $0x40] sm:$0xff]
        %v260 = vld [vmem:[%s218 + $0x48] sm:$0xff]
        %v261 = vld [vmem:[%s218 + $0x50] sm:$0xff]
        %v262 = vld [vmem:[%s218 + $0x58] sm:$0xff]
        %v263 = vld [vmem:[%s218 + $0x60] sm:$0xff]
        %v264 = vld [vmem:[%s218 + $0x68] sm:$0xff]
        %v265 = vld [vmem:[%s218 + $0x70] sm:$0xff]
        %v266 = vld [vmem:[%s218 + $0x78] sm:$0xff]
        %v267 = vld [vmem:[%s218 + $0x80] sm:$0xff]
        %v268 = vld [vmem:[%s218 + $0x88] sm:$0xff]
        %v269 = vld [vmem:[%s218 + $0x90] sm:$0xff]
        %v270 = vld [vmem:[%s218 + $0x98] sm:$0xff]
        %v271 = vld [vmem:[%s218 + $0xa0] sm:$0xff]
        %v272 = vld [vmem:[%s218 + $0xa8] sm:$0xff]
        %v273 = vld [vmem:[%s218 + $0xb0] sm:$0xff]
        %v274 = vld [vmem:[%s218 + $0xb8] sm:$0xff]
        %v275 = vld [vmem:[%s218 + $0xc0] sm:$0xff]
        %v276 = vld [vmem:[%s218 + $0xc8] sm:$0xff]
        %v277 = vld [vmem:[%s218 + $0xd0] sm:$0xff]
        %v278 = vld [vmem:[%s218 + $0xd8] sm:$0xff]
        %v279 = vld [vmem:[%s218 + $0xe0] sm:$0xff]
        %v280 = vld [vmem:[%s218 + $0xe8] sm:$0xff]
        %v281 = vld [vmem:[%s218 + $0xf0] sm:$0xff]
        %v282 = vld [vmem:[%s218 + $0xf8] sm:$0xff]
        %vm283 = vcmask 261120
        %v284 = vsel %vm283, %v251, 0.0
        %285 = vadd.xlane.f32.xlu0 %v284
        %v286 = vpop.xlane.xlu0 %285
        %v287 = vsel %vm283, %v252, 0.0
        %288 = vadd.xlane.f32.xlu0 %v287
        %v289 = vpop.xlane.xlu0 %288
        %v290 = vsel %vm283, %v253, 0.0
        %291 = vadd.xlane.f32.xlu0 %v290
        %v292 = vpop.xlane.xlu0 %291
        %v293 = vsel %vm283, %v254, 0.0
        %294 = vadd.xlane.f32.xlu0 %v293
        %v295 = vpop.xlane.xlu0 %294
        %v296 = vsel %vm283, %v255, 0.0
        %297 = vadd.xlane.f32.xlu0 %v296
        %v298 = vpop.xlane.xlu0 %297
        %v299 = vsel %vm283, %v256, 0.0
        %300 = vadd.xlane.f32.xlu0 %v299
        %v301 = vpop.xlane.xlu0 %300
        %v302 = vsel %vm283, %v257, 0.0
        %303 = vadd.xlane.f32.xlu0 %v302
        %v304 = vpop.xlane.xlu0 %303
        %v305 = vsel %vm283, %v258, 0.0
        %306 = vadd.xlane.f32.xlu0 %v305
        %v307 = vpop.xlane.xlu0 %306
        %v308 = vsel %vm283, %v259, 0.0
        %309 = vadd.xlane.f32.xlu0 %v308
        %v310 = vpop.xlane.xlu0 %309
        %v311 = vsel %vm283, %v260, 0.0
        %312 = vadd.xlane.f32.xlu0 %v311
        %v313 = vpop.xlane.xlu0 %312
        %v314 = vsel %vm283, %v261, 0.0
        %315 = vadd.xlane.f32.xlu0 %v314
        %v316 = vpop.xlane.xlu0 %315
        %v317 = vsel %vm283, %v262, 0.0
        %318 = vadd.xlane.f32.xlu0 %v317
        %v319 = vpop.xlane.xlu0 %318
        %v320 = vsel %vm283, %v263, 0.0
        %321 = vadd.xlane.f32.xlu0 %v320
        %v322 = vpop.xlane.xlu0 %321
        %v323 = vsel %vm283, %v264, 0.0
        %324 = vadd.xlane.f32.xlu0 %v323
        %v325 = vpop.xlane.xlu0 %324
        %v326 = vsel %vm283, %v265, 0.0
        %327 = vadd.xlane.f32.xlu0 %v326
        %v328 = vpop.xlane.xlu0 %327
        %v329 = vsel %vm283, %v266, 0.0
        %330 = vadd.xlane.f32.xlu0 %v329
        %v331 = vpop.xlane.xlu0 %330
        %v332 = vsel %vm283, %v267, 0.0
        %333 = vadd.xlane.f32.xlu0 %v332
        %v334 = vpop.xlane.xlu0 %333
        %v335 = vsel %vm283, %v268, 0.0
        %336 = vadd.xlane.f32.xlu0 %v335
        %v337 = vpop.xlane.xlu0 %336
        %v338 = vsel %vm283, %v269, 0.0
        %339 = vadd.xlane.f32.xlu0 %v338
        %v340 = vpop.xlane.xlu0 %339
        %v341 = vsel %vm283, %v270, 0.0
        %342 = vadd.xlane.f32.xlu0 %v341
        %v343 = vpop.xlane.xlu0 %342
        %v344 = vsel %vm283, %v271, 0.0
        %345 = vadd.xlane.f32.xlu0 %v344
        %v346 = vpop.xlane.xlu0 %345
        %v347 = vsel %vm283, %v272, 0.0
        %348 = vadd.xlane.f32.xlu0 %v347
        %v349 = vpop.xlane.xlu0 %348
        %v350 = vsel %vm283, %v273, 0.0
        %351 = vadd.xlane.f32.xlu0 %v350
        %v352 = vpop.xlane.xlu0 %351
        %v353 = vsel %vm283, %v274, 0.0
        %354 = vadd.xlane.f32.xlu0 %v353
        %v355 = vpop.xlane.xlu0 %354
        %v356 = vsel %vm283, %v275, 0.0
        %357 = vadd.xlane.f32.xlu0 %v356
        %v358 = vpop.xlane.xlu0 %357
        %v359 = vsel %vm283, %v276, 0.0
        %360 = vadd.xlane.f32.xlu0 %v359
        %v361 = vpop.xlane.xlu0 %360
        %v362 = vsel %vm283, %v277, 0.0
        %363 = vadd.xlane.f32.xlu0 %v362
        %v364 = vpop.xlane.xlu0 %363
        %v365 = vsel %vm283, %v278, 0.0
        %366 = vadd.xlane.f32.xlu0 %v365
        %v367 = vpop.xlane.xlu0 %366
        %v368 = vsel %vm283, %v279, 0.0
        %369 = vadd.xlane.f32.xlu0 %v368
        %v370 = vpop.xlane.xlu0 %369
        %v371 = vsel %vm283, %v280, 0.0
        %372 = vadd.xlane.f32.xlu0 %v371
        %v373 = vpop.xlane.xlu0 %372
        %v374 = vsel %vm283, %v281, 0.0
        %375 = vadd.xlane.f32.xlu0 %v374
        %v376 = vpop.xlane.xlu0 %375
        %v377 = vsel %vm283, %v282, 0.0
        %378 = vadd.xlane.f32.xlu0 %v377
        %v379 = vpop.xlane.xlu0 %378
        %v380 = vrcp.pop 32.0
        %v381 = vmul.f32 %v286, %v380
        %v382 = vmul.f32 %v289, %v380
        %v383 = vmul.f32 %v292, %v380
        %v384 = vmul.f32 %v295, %v380
        %v385 = vmul.f32 %v298, %v380
        %v386 = vmul.f32 %v301, %v380
        %v387 = vmul.f32 %v304, %v380
        %v388 = vmul.f32 %v307, %v380
        %v389 = vmul.f32 %v310, %v380
        %v390 = vmul.f32 %v313, %v380
        %v391 = vmul.f32 %v316, %v380
        %v392 = vmul.f32 %v319, %v380
        %v393 = vmul.f32 %v322, %v380
        %v394 = vmul.f32 %v325, %v380
        %v395 = vmul.f32 %v328, %v380
        %v396 = vmul.f32 %v331, %v380
        %v397 = vmul.f32 %v334, %v380
        %v398 = vmul.f32 %v337, %v380
        %v399 = vmul.f32 %v340, %v380
        %v400 = vmul.f32 %v343, %v380
        %v401 = vmul.f32 %v346, %v380
        %v402 = vmul.f32 %v349, %v380
        %v403 = vmul.f32 %v352, %v380
        %v404 = vmul.f32 %v355, %v380
        %v405 = vmul.f32 %v358, %v380
        %v406 = vmul.f32 %v361, %v380
        %v407 = vmul.f32 %v364, %v380
        %v408 = vmul.f32 %v367, %v380
        %v409 = vmul.f32 %v370, %v380
        %v410 = vmul.f32 %v373, %v380
        %v411 = vmul.f32 %v376, %v380
        %v412 = vmul.f32 %v379, %v380
        %v413 = vsub.f32 %v251, %v381
        %v414 = vsub.f32 %v252, %v382
        %v415 = vsub.f32 %v253, %v383
        %v416 = vsub.f32 %v254, %v384
        %v417 = vsub.f32 %v255, %v385
        %v418 = vsub.f32 %v256, %v386
        %v419 = vsub.f32 %v257, %v387
        %v420 = vsub.f32 %v258, %v388
        %v421 = vsub.f32 %v259, %v389
        %v422 = vsub.f32 %v260, %v390
        %v423 = vsub.f32 %v261, %v391
        %v424 = vsub.f32 %v262, %v392
        %v425 = vsub.f32 %v263, %v393
        %v426 = vsub.f32 %v264, %v394
        %v427 = vsub.f32 %v265, %v395
        %v428 = vsub.f32 %v266, %v396
        %v429 = vsub.f32 %v267, %v397
        %v430 = vsub.f32 %v268, %v398
        %v431 = vsub.f32 %v269, %v399
        %v432 = vsub.f32 %v270, %v400
        %v433 = vsub.f32 %v271, %v401
        %v434 = vsub.f32 %v272, %v402
        %v435 = vsub.f32 %v273, %v403
        %v436 = vsub.f32 %v274, %v404
        %v437 = vsub.f32 %v275, %v405
        %v438 = vsub.f32 %v276, %v406
        %v439 = vsub.f32 %v277, %v407
        %v440 = vsub.f32 %v278, %v408
        %v441 = vsub.f32 %v279, %v409
        %v442 = vsub.f32 %v280, %v410
        %v443 = vsub.f32 %v281, %v411
        %v444 = vsub.f32 %v282, %v412
        %v445 = vmul.f32 %v413, %v413
        %v446 = vmul.f32 %v414, %v414
        %v447 = vmul.f32 %v415, %v415
        %v448 = vmul.f32 %v416, %v416
        %v449 = vmul.f32 %v417, %v417
        %v450 = vmul.f32 %v418, %v418
        %v451 = vmul.f32 %v419, %v419
        %v452 = vmul.f32 %v420, %v420
        %v453 = vmul.f32 %v421, %v421
        %v454 = vmul.f32 %v422, %v422
        %v455 = vmul.f32 %v423, %v423
        %v456 = vmul.f32 %v424, %v424
        %v457 = vmul.f32 %v425, %v425
        %v458 = vmul.f32 %v426, %v426
        %v459 = vmul.f32 %v427, %v427
        %v460 = vmul.f32 %v428, %v428
        %v461 = vmul.f32 %v429, %v429
        %v462 = vmul.f32 %v430, %v430
        %v463 = vmul.f32 %v431, %v431
        %v464 = vmul.f32 %v432, %v432
        %v465 = vmul.f32 %v433, %v433
        %v466 = vmul.f32 %v434, %v434
        %v467 = vmul.f32 %v435, %v435
        %v468 = vmul.f32 %v436, %v436
        %v469 = vmul.f32 %v437, %v437
        %v470 = vmul.f32 %v438, %v438
        %v471 = vmul.f32 %v439, %v439
        %v472 = vmul.f32 %v440, %v440
        %v473 = vmul.f32 %v441, %v441
        %v474 = vmul.f32 %v442, %v442
        %v475 = vmul.f32 %v443, %v443
        %v476 = vmul.f32 %v444, %v444
        %v477 = vsel %vm283, %v445, 0.0
        %478 = vadd.xlane.f32.xlu0 %v477
        %v479 = vpop.xlane.xlu0 %478
        %v480 = vsel %vm283, %v446, 0.0
        %481 = vadd.xlane.f32.xlu0 %v480
        %v482 = vpop.xlane.xlu0 %481
        %v483 = vsel %vm283, %v447, 0.0
        %484 = vadd.xlane.f32.xlu0 %v483
        %v485 = vpop.xlane.xlu0 %484
        %v486 = vsel %vm283, %v448, 0.0
        %487 = vadd.xlane.f32.xlu0 %v486
        %v488 = vpop.xlane.xlu0 %487
        %v489 = vsel %vm283, %v449, 0.0
        %490 = vadd.xlane.f32.xlu0 %v489
        %v491 = vpop.xlane.xlu0 %490
        %v492 = vsel %vm283, %v450, 0.0
        %493 = vadd.xlane.f32.xlu0 %v492
        %v494 = vpop.xlane.xlu0 %493
        %v495 = vsel %vm283, %v451, 0.0
        %496 = vadd.xlane.f32.xlu0 %v495
        %v497 = vpop.xlane.xlu0 %496
        %v498 = vsel %vm283, %v452, 0.0
        %499 = vadd.xlane.f32.xlu0 %v498
        %v500 = vpop.xlane.xlu0 %499
        %v501 = vsel %vm283, %v453, 0.0
        %502 = vadd.xlane.f32.xlu0 %v501
        %v503 = vpop.xlane.xlu0 %502
        %v504 = vsel %vm283, %v454, 0.0
        %505 = vadd.xlane.f32.xlu0 %v504
        %v506 = vpop.xlane.xlu0 %505
        %v507 = vsel %vm283, %v455, 0.0
        %508 = vadd.xlane.f32.xlu0 %v507
        %v509 = vpop.xlane.xlu0 %508
        %v510 = vsel %vm283, %v456, 0.0
        %511 = vadd.xlane.f32.xlu0 %v510
        %v512 = vpop.xlane.xlu0 %511
        %v513 = vsel %vm283, %v457, 0.0
        %514 = vadd.xlane.f32.xlu0 %v513
        %v515 = vpop.xlane.xlu0 %514
        %v516 = vsel %vm283, %v458, 0.0
        %517 = vadd.xlane.f32.xlu0 %v516
        %v518 = vpop.xlane.xlu0 %517
        %v519 = vsel %vm283, %v459, 0.0
        %520 = vadd.xlane.f32.xlu0 %v519
        %v521 = vpop.xlane.xlu0 %520
        %v522 = vsel %vm283, %v460, 0.0
        %523 = vadd.xlane.f32.xlu0 %v522
        %v524 = vpop.xlane.xlu0 %523
        %v525 = vsel %vm283, %v461, 0.0
        %526 = vadd.xlane.f32.xlu0 %v525
        %v527 = vpop.xlane.xlu0 %526
        %v528 = vsel %vm283, %v462, 0.0
        %529 = vadd.xlane.f32.xlu0 %v528
        %v530 = vpop.xlane.xlu0 %529
        %v531 = vsel %vm283, %v463, 0.0
        %532 = vadd.xlane.f32.xlu0 %v531
        %v533 = vpop.xlane.xlu0 %532
        %v534 = vsel %vm283, %v464, 0.0
        %535 = vadd.xlane.f32.xlu0 %v534
        %v536 = vpop.xlane.xlu0 %535
        %v537 = vsel %vm283, %v465, 0.0
        %538 = vadd.xlane.f32.xlu0 %v537
        %v539 = vpop.xlane.xlu0 %538
        %v540 = vsel %vm283, %v466, 0.0
        %541 = vadd.xlane.f32.xlu0 %v540
        %v542 = vpop.xlane.xlu0 %541
        %v543 = vsel %vm283, %v467, 0.0
        %544 = vadd.xlane.f32.xlu0 %v543
        %v545 = vpop.xlane.xlu0 %544
        %v546 = vsel %vm283, %v468, 0.0
        %547 = vadd.xlane.f32.xlu0 %v546
        %v548 = vpop.xlane.xlu0 %547
        %v549 = vsel %vm283, %v469, 0.0
        %550 = vadd.xlane.f32.xlu0 %v549
        %v551 = vpop.xlane.xlu0 %550
        %v552 = vsel %vm283, %v470, 0.0
        %553 = vadd.xlane.f32.xlu0 %v552
        %v554 = vpop.xlane.xlu0 %553
        %v555 = vsel %vm283, %v471, 0.0
        %556 = vadd.xlane.f32.xlu0 %v555
        %v557 = vpop.xlane.xlu0 %556
        %v558 = vsel %vm283, %v472, 0.0
        %559 = vadd.xlane.f32.xlu0 %v558
        %v560 = vpop.xlane.xlu0 %559
        %v561 = vsel %vm283, %v473, 0.0
        %562 = vadd.xlane.f32.xlu0 %v561
        %v563 = vpop.xlane.xlu0 %562
        %v564 = vsel %vm283, %v474, 0.0
        %565 = vadd.xlane.f32.xlu0 %v564
        %v566 = vpop.xlane.xlu0 %565
        %v567 = vsel %vm283, %v475, 0.0
        %568 = vadd.xlane.f32.xlu0 %v567
        %v569 = vpop.xlane.xlu0 %568
        %v570 = vsel %vm283, %v476, 0.0
        %571 = vadd.xlane.f32.xlu0 %v570
        %v572 = vpop.xlane.xlu0 %571
        %v573 = vmul.f32 %v479, %v380
        %v574 = vmul.f32 %v482, %v380
        %v575 = vmul.f32 %v485, %v380
        %v576 = vmul.f32 %v488, %v380
        %v577 = vmul.f32 %v491, %v380
        %v578 = vmul.f32 %v494, %v380
        %v579 = vmul.f32 %v497, %v380
        %v580 = vmul.f32 %v500, %v380
        %v581 = vmul.f32 %v503, %v380
        %v582 = vmul.f32 %v506, %v380
        %v583 = vmul.f32 %v509, %v380
        %v584 = vmul.f32 %v512, %v380
        %v585 = vmul.f32 %v515, %v380
        %v586 = vmul.f32 %v518, %v380
        %v587 = vmul.f32 %v521, %v380
        %v588 = vmul.f32 %v524, %v380
        %v589 = vmul.f32 %v527, %v380
        %v590 = vmul.f32 %v530, %v380
        %v591 = vmul.f32 %v533, %v380
        %v592 = vmul.f32 %v536, %v380
        %v593 = vmul.f32 %v539, %v380
        %v594 = vmul.f32 %v542, %v380
        %v595 = vmul.f32 %v545, %v380
        %v596 = vmul.f32 %v548, %v380
        %v597 = vmul.f32 %v551, %v380
        %v598 = vmul.f32 %v554, %v380
        %v599 = vmul.f32 %v557, %v380
        %v600 = vmul.f32 %v560, %v380
        %v601 = vmul.f32 %v563, %v380
        %v602 = vmul.f32 %v566, %v380
        %v603 = vmul.f32 %v569, %v380
        %v604 = vmul.f32 %v572, %v380
        %v605 = vadd.f32 %v573, 1e-05
        %v606 = vadd.f32 %v574, 1e-05
        %v607 = vadd.f32 %v575, 1e-05
        %v608 = vadd.f32 %v576, 1e-05
        %v609 = vadd.f32 %v577, 1e-05
        %v610 = vadd.f32 %v578, 1e-05
        %v611 = vadd.f32 %v579, 1e-05
        %v612 = vadd.f32 %v580, 1e-05
        %v613 = vadd.f32 %v581, 1e-05
        %v614 = vadd.f32 %v582, 1e-05
        %v615 = vadd.f32 %v583, 1e-05
        %v616 = vadd.f32 %v584, 1e-05
        %v617 = vadd.f32 %v585, 1e-05
        %v618 = vadd.f32 %v586, 1e-05
        %v619 = vadd.f32 %v587, 1e-05
        %v620 = vadd.f32 %v588, 1e-05
        %v621 = vadd.f32 %v589, 1e-05
        %v622 = vadd.f32 %v590, 1e-05
        %v623 = vadd.f32 %v591, 1e-05
        %v624 = vadd.f32 %v592, 1e-05
        %v625 = vadd.f32 %v593, 1e-05
        %v626 = vadd.f32 %v594, 1e-05
        %v627 = vadd.f32 %v595, 1e-05
        %v628 = vadd.f32 %v596, 1e-05
        %v629 = vadd.f32 %v597, 1e-05
        %v630 = vadd.f32 %v598, 1e-05
        %v631 = vadd.f32 %v599, 1e-05
        %v632 = vadd.f32 %v600, 1e-05
        %v633 = vadd.f32 %v601, 1e-05
        %v634 = vadd.f32 %v602, 1e-05
        %v635 = vadd.f32 %v603, 1e-05
        %v636 = vadd.f32 %v604, 1e-05
        %v637 = vrsqrt.pop %v605
        %v638 = vrsqrt.pop %v606
        %v639 = vrsqrt.pop %v607
        %v640 = vrsqrt.pop %v608
        %v641 = vrsqrt.pop %v609
        %v642 = vrsqrt.pop %v610
        %v643 = vrsqrt.pop %v611
        %v644 = vrsqrt.pop %v612
        %v645 = vrsqrt.pop %v613
        %v646 = vrsqrt.pop %v614
        %v647 = vrsqrt.pop %v615
        %v648 = vrsqrt.pop %v616
        %v649 = vrsqrt.pop %v617
        %v650 = vrsqrt.pop %v618
        %v651 = vrsqrt.pop %v619
        %v652 = vrsqrt.pop %v620
        %v653 = vrsqrt.pop %v621
        %v654 = vrsqrt.pop %v622
        %v655 = vrsqrt.pop %v623
        %v656 = vrsqrt.pop %v624
        %v657 = vrsqrt.pop %v625
        %v658 = vrsqrt.pop %v626
        %v659 = vrsqrt.pop %v627
        %v660 = vrsqrt.pop %v628
        %v661 = vrsqrt.pop %v629
        %v662 = vrsqrt.pop %v630
        %v663 = vrsqrt.pop %v631
        %v664 = vrsqrt.pop %v632
        %v665 = vrsqrt.pop %v633
        %v666 = vrsqrt.pop %v634
        %v667 = vrsqrt.pop %v635
        %v668 = vrsqrt.pop %v636
        %v669 = vmul.f32 %v413, %v637
        %v670 = vmul.f32 %v414, %v638
        %v671 = vmul.f32 %v415, %v639
        %v672 = vmul.f32 %v416, %v640
        %v673 = vmul.f32 %v417, %v641
        %v674 = vmul.f32 %v418, %v642
        %v675 = vmul.f32 %v419, %v643
        %v676 = vmul.f32 %v420, %v644
        %v677 = vmul.f32 %v421, %v645
        %v678 = vmul.f32 %v422, %v646
        %v679 = vmul.f32 %v423, %v647
        %v680 = vmul.f32 %v424, %v648
        %v681 = vmul.f32 %v425, %v649
        %v682 = vmul.f32 %v426, %v650
        %v683 = vmul.f32 %v427, %v651
        %v684 = vmul.f32 %v428, %v652
        %v685 = vmul.f32 %v429, %v653
        %v686 = vmul.f32 %v430, %v654
        %v687 = vmul.f32 %v431, %v655
        %v688 = vmul.f32 %v432, %v656
        %v689 = vmul.f32 %v433, %v657
        %v690 = vmul.f32 %v434, %v658
        %v691 = vmul.f32 %v435, %v659
        %v692 = vmul.f32 %v436, %v660
        %v693 = vmul.f32 %v437, %v661
        %v694 = vmul.f32 %v438, %v662
        %v695 = vmul.f32 %v439, %v663
        %v696 = vmul.f32 %v440, %v664
        %v697 = vmul.f32 %v441, %v665
        %v698 = vmul.f32 %v442, %v666
        %v699 = vmul.f32 %v443, %v667
        %v700 = vmul.f32 %v444, %v668
        %v701 = vld [vmem:[%s2] sm:$0xf]
        %v702 = vld [vmem:[%s3] sm:$0xf]
        %704 = vset.pattern.permute.xlu0 0
        %705 = vperm.xlu0 %704, %v702
        %v706 = vpop.permute.xlu0 %705
        %v709 = vsel %vm283, %v701, 0
        %v712 = vsel %vm283, %v669, 0
        %v715 = vsel %vm283, %v670, 0
        %v718 = vsel %vm283, %v671, 0
        %v721 = vsel %vm283, %v672, 0
        %v724 = vsel %vm283, %v673, 0
        %v727 = vsel %vm283, %v674, 0
        %v730 = vsel %vm283, %v675, 0
        %v733 = vsel %vm283, %v676, 0
        %v736 = vsel %vm283, %v677, 0
        %v739 = vsel %vm283, %v678, 0
        %v742 = vsel %vm283, %v679, 0
        %v745 = vsel %vm283, %v680, 0
        %v748 = vsel %vm283, %v681, 0
        %v751 = vsel %vm283, %v682, 0
        %v754 = vsel %vm283, %v683, 0
        %v757 = vsel %vm283, %v684, 0
        %v760 = vsel %vm283, %v685, 0
        %v763 = vsel %vm283, %v686, 0
        %v766 = vsel %vm283, %v687, 0
        %v769 = vsel %vm283, %v688, 0
        %v772 = vsel %vm283, %v689, 0
        %v775 = vsel %vm283, %v690, 0
        %v778 = vsel %vm283, %v691, 0
        %v781 = vsel %vm283, %v692, 0
        %v784 = vsel %vm283, %v693, 0
        %v787 = vsel %vm283, %v694, 0
        %v790 = vsel %vm283, %v695, 0
        %v793 = vsel %vm283, %v696, 0
        %v796 = vsel %vm283, %v697, 0
        %v799 = vsel %vm283, %v698, 0
        %v802 = vsel %vm283, %v699, 0
        %v805 = vsel %vm283, %v700, 0
        %807 = vmatprep.subr.mxu0 0.0
        %808 = vmatpush1.xpose.msra.mxu0 %v712
        %809 = vmatprep.subr.mxu0 0.0
        %810 = vmatpush1.xpose.msra.mxu0 %v715
        %811 = vmatprep.subr.mxu0 0.0
        %812 = vmatpush1.xpose.msra.mxu0 %v718
        %813 = vmatprep.subr.mxu0 0.0
        %814 = vmatpush1.xpose.msra.mxu0 %v721
        %815 = vmatprep.subr.mxu0 0.0
        %816 = vmatpush1.xpose.msra.mxu0 %v724
        %817 = vmatprep.subr.mxu0 0.0
        %818 = vmatpush1.xpose.msra.mxu0 %v727
        %819 = vmatprep.subr.mxu0 0.0
        %820 = vmatpush1.xpose.msra.mxu0 %v730
        %821 = vmatprep.subr.mxu0 0.0
        %822 = vmatpush1.xpose.msra.mxu0 %v733
        %823 = vmatprep.subr.mxu0 0.0
        %824 = vmatpush1.xpose.msra.mxu0 %v736
        %825 = vmatprep.subr.mxu0 0.0
        %826 = vmatpush1.xpose.msra.mxu0 %v739
        %827 = vmatprep.subr.mxu0 0.0
        %828 = vmatpush1.xpose.msra.mxu0 %v742
        %829 = vmatprep.subr.mxu0 0.0
        %830 = vmatpush1.xpose.msra.mxu0 %v745
        %831 = vmatprep.subr.mxu0 0.0
        %832 = vmatpush1.xpose.msra.mxu0 %v748
        %833 = vmatprep.subr.mxu0 0.0
        %834 = vmatpush1.xpose.msra.mxu0 %v751
        %835 = vmatprep.subr.mxu0 0.0
        %836 = vmatpush1.xpose.msra.mxu0 %v754
        %837 = vmatprep.subr.mxu0 0.0
        %838 = vmatpush1.xpose.msra.mxu0 %v757
        %839 = vmatprep.subr.mxu0 0.0
        %840 = vmatpush1.xpose.msra.mxu0 %v760
        %841 = vmatprep.subr.mxu0 0.0
        %842 = vmatpush1.xpose.msra.mxu0 %v763
        %843 = vmatprep.subr.mxu0 0.0
        %844 = vmatpush1.xpose.msra.mxu0 %v766
        %845 = vmatprep.subr.mxu0 0.0
        %846 = vmatpush1.xpose.msra.mxu0 %v769
        %847 = vmatprep.subr.mxu0 0.0
        %848 = vmatpush1.xpose.msra.mxu0 %v772
        %849 = vmatprep.subr.mxu0 0.0
        %850 = vmatpush1.xpose.msra.mxu0 %v775
        %851 = vmatprep.subr.mxu0 0.0
        %852 = vmatpush1.xpose.msra.mxu0 %v778
        %853 = vmatprep.subr.mxu0 0.0
        %854 = vmatpush1.xpose.msra.mxu0 %v781
        %855 = vmatprep.subr.mxu0 0.0
        %856 = vmatpush1.xpose.msra.mxu0 %v784
        %857 = vmatprep.subr.mxu0 0.0
        %858 = vmatpush1.xpose.msra.mxu0 %v787
        %859 = vmatprep.subr.mxu0 0.0
        %860 = vmatpush1.xpose.msra.mxu0 %v790
        %861 = vmatprep.subr.mxu0 0.0
        %862 = vmatpush1.xpose.msra.mxu0 %v793
        %863 = vmatprep.subr.mxu0 0.0
        %864 = vmatpush1.xpose.msra.mxu0 %v796
        %865 = vmatprep.subr.mxu0 0.0
        %866 = vmatpush1.xpose.msra.mxu0 %v799
        %867 = vmatprep.subr.mxu0 0.0
        %868 = vmatpush1.xpose.msra.mxu0 %v802
        %869 = vmatprep.subr.mxu0 0.0
        %870 = vmatpush1.xpose.msra.mxu0 %v805
        %871 = vmatprep.mubr.f32.mxu0 0.0
        %872 = vmatmul.mubr.f32.gmra.mrb[0].mxu0 %v709
        %v873 = vpop.f32.mrb[0].mxu0
        %v874 = vadd.f32 %v706, %v873
        %v875 = vpop.f32.mrb[0].mxu0
        %v876 = vadd.f32 %v706, %v875
        %877 = vdwg.mxu0
        %879 = vrot.lane.b32.xlu0 %v874, 112
        %v880 = vpop.permute.xlu0 %879
        %882 = vrot.lane.b32.xlu0 %v874, 96
        %v883 = vpop.permute.xlu0 %882
        %885 = vrot.lane.b32.xlu0 %v874, 80
        %v886 = vpop.permute.xlu0 %885
        %888 = vrot.lane.b32.xlu0 %v874, 64
        %v889 = vpop.permute.xlu0 %888
        %891 = vrot.lane.b32.xlu0 %v874, 48
        %v892 = vpop.permute.xlu0 %891
        %894 = vrot.lane.b32.xlu0 %v874, 32
        %v895 = vpop.permute.xlu0 %894
        %897 = vrot.lane.b32.xlu0 %v874, 16
        %v898 = vpop.permute.xlu0 %897
        %901 = vrot.lane.b32.xlu0 %v876, 112
        %v902 = vpop.permute.xlu0 %901
        %904 = vrot.lane.b32.xlu0 %v876, 96
        %v905 = vpop.permute.xlu0 %904
        %907 = vrot.lane.b32.xlu0 %v876, 80
        %v908 = vpop.permute.xlu0 %907
        %910 = vrot.lane.b32.xlu0 %v876, 64
        %v911 = vpop.permute.xlu0 %910
        %913 = vrot.lane.b32.xlu0 %v876, 48
        %v914 = vpop.permute.xlu0 %913
        %916 = vrot.lane.b32.xlu0 %v876, 32
        %v917 = vpop.permute.xlu0 %916
        %919 = vrot.lane.b32.xlu0 %v876, 16
        %v920 = vpop.permute.xlu0 %919
        %v922 = vcombine.low %v874, %v883
        %v924 = vunpack.c.l.s4 1983009808
        %v925 = vunpack.c.0.s8 %v924
        %v926 = vlaneseq
        %v927 = vshrl.u32 %v926, 7
        %v928 = vsub.s32 %v925, %v927
        %v929 = vrot.slane %v922, %v928
        %v930 = vcombine.low %v880, %v886
        %v932 = vunpack.c.l.s4 1983009808
        %v933 = vunpack.c.0.s8 %v932
        %v934 = vlaneseq
        %v935 = vshrl.u32 %v934, 7
        %v936 = vsub.s32 %v933, %v935
        %v937 = vrot.slane %v930, %v936
        %v938 = vcombine.low %v889, %v895
        %v940 = vunpack.c.l.s4 1983009808
        %v941 = vunpack.c.0.s8 %v940
        %v942 = vlaneseq
        %v943 = vshrl.u32 %v942, 7
        %v944 = vsub.s32 %v941, %v943
        %v945 = vrot.slane %v938, %v944
        %v946 = vcombine.low %v892, %v898
        %v948 = vunpack.c.l.s4 1983009808
        %v949 = vunpack.c.0.s8 %v948
        %v950 = vlaneseq
        %v951 = vshrl.u32 %v950, 7
        %v952 = vsub.s32 %v949, %v951
        %v953 = vrot.slane %v946, %v952
        %v954 = vcombine.low %v929, %v937
        %v955 = vcombine.high %v929, %v937
        %v957 = vunpack.c.l.s4 1934713408
        %v958 = vunpack.c.0.s8 %v957
        %v959 = vlaneseq
        %v960 = vshrl.u32 %v959, 7
        %v961 = vsub.s32 %v958, %v960
        %v962 = vrot.slane %v954, %v961
        %v964 = vunpack.c.l.s4 1934713408
        %v965 = vunpack.c.0.s8 %v964
        %v966 = vlaneseq
        %v967 = vshrl.u32 %v966, 7
        %v968 = vsub.s32 %v965, %v967
        %v969 = vrot.slane %v955, %v968
        %v970 = vcombine.low %v945, %v953
        %v971 = vcombine.high %v945, %v953
        %v973 = vunpack.c.l.s4 1934713408
        %v974 = vunpack.c.0.s8 %v973
        %v975 = vlaneseq
        %v976 = vshrl.u32 %v975, 7
        %v977 = vsub.s32 %v974, %v976
        %v978 = vrot.slane %v970, %v977
        %v980 = vunpack.c.l.s4 1934713408
        %v981 = vunpack.c.0.s8 %v980
        %v982 = vlaneseq
        %v983 = vshrl.u32 %v982, 7
        %v984 = vsub.s32 %v981, %v983
        %v985 = vrot.slane %v971, %v984
        %v986 = vcombine.low %v962, %v978
        %v987 = vcombine.high %v962, %v978
        %v988 = vcombine.low %v969, %v985
        %v989 = vcombine.high %v969, %v985
        %v990 = vcombine.low %v876, %v905
        %v992 = vunpack.c.l.s4 1983009808
        %v993 = vunpack.c.0.s8 %v992
        %v994 = vlaneseq
        %v995 = vshrl.u32 %v994, 7
        %v996 = vsub.s32 %v993, %v995
        %v997 = vrot.slane %v990, %v996
        %v998 = vcombine.low %v902, %v908
        %v1000 = vunpack.c.l.s4 1983009808
        %v1001 = vunpack.c.0.s8 %v1000
        %v1002 = vlaneseq
        %v1003 = vshrl.u32 %v1002, 7
        %v1004 = vsub.s32 %v1001, %v1003
        %v1005 = vrot.slane %v998, %v1004
        %v1006 = vcombine.low %v911, %v917
        %v1008 = vunpack.c.l.s4 1983009808
        %v1009 = vunpack.c.0.s8 %v1008
        %v1010 = vlaneseq
        %v1011 = vshrl.u32 %v1010, 7
        %v1012 = vsub.s32 %v1009, %v1011
        %v1013 = vrot.slane %v1006, %v1012
        %v1014 = vcombine.low %v914, %v920
        %v1016 = vunpack.c.l.s4 1983009808
        %v1017 = vunpack.c.0.s8 %v1016
        %v1018 = vlaneseq
        %v1019 = vshrl.u32 %v1018, 7
        %v1020 = vsub.s32 %v1017, %v1019
        %v1021 = vrot.slane %v1014, %v1020
        %v1022 = vcombine.low %v997, %v1005
        %v1023 = vcombine.high %v997, %v1005
        %v1025 = vunpack.c.l.s4 1934713408
        %v1026 = vunpack.c.0.s8 %v1025
        %v1027 = vlaneseq
        %v1028 = vshrl.u32 %v1027, 7
        %v1029 = vsub.s32 %v1026, %v1028
        %v1030 = vrot.slane %v1022, %v1029
        %v1032 = vunpack.c.l.s4 1934713408
        %v1033 = vunpack.c.0.s8 %v1032
        %v1034 = vlaneseq
        %v1035 = vshrl.u32 %v1034, 7
        %v1036 = vsub.s32 %v1033, %v1035
        %v1037 = vrot.slane %v1023, %v1036
        %v1038 = vcombine.low %v1013, %v1021
        %v1039 = vcombine.high %v1013, %v1021
        %v1041 = vunpack.c.l.s4 1934713408
        %v1042 = vunpack.c.0.s8 %v1041
        %v1043 = vlaneseq
        %v1044 = vshrl.u32 %v1043, 7
        %v1045 = vsub.s32 %v1042, %v1044
        %v1046 = vrot.slane %v1038, %v1045
        %v1048 = vunpack.c.l.s4 1934713408
        %v1049 = vunpack.c.0.s8 %v1048
        %v1050 = vlaneseq
        %v1051 = vshrl.u32 %v1050, 7
        %v1052 = vsub.s32 %v1049, %v1051
        %v1053 = vrot.slane %v1039, %v1052
        %v1054 = vcombine.low %v1030, %v1046
        %v1055 = vcombine.high %v1030, %v1046
        %v1056 = vcombine.low %v1037, %v1053
        %v1057 = vcombine.high %v1037, %v1053
        %v1058 = vld [vmem:[%s249] sm:$0x1]
        %vm1059 = vcmp.gt.f32.partialorder %v1058, 0.5
        %v1060 = vsel %vm1059, 1, 0
        %v1061 = vlaneseq
        %v1062 = vshrl.u32 %v1061, 7
        %v1063 = vsub.s32 0, %v1062
        %v1064 = vrot.slane %v1060, %v1063
        %vm1065 = vcmp.eq.s32.totalorder %v1064, 1
        %v1066 = vsel %vm1065, %v986, -1e+30
        %v1067 = vsel %vm1065, %v1054, -1e+30
        %v1068 = vsel %vm1065, %v987, -1e+30
        %v1069 = vsel %vm1065, %v1055, -1e+30
        %v1070 = vsel %vm1065, %v988, -1e+30
        %v1071 = vsel %vm1065, %v1056, -1e+30
        %v1072 = vsel %vm1065, %v989, -1e+30
        %v1073 = vsel %vm1065, %v1057, -1e+30
        %vm1074 = vcmask 130048
        %1075 = vst.msk [vmem:[%s245] sm:$0xff] %vm1074, %v1066
        %1076 = vst.msk [vmem:[%s245 + $0x8] sm:$0xff] %vm1074, %v1067
        %1077 = vst.msk [vmem:[%s245 + $0x10] sm:$0xff] %vm1074, %v1068
        %1078 = vst.msk [vmem:[%s245 + $0x18] sm:$0xff] %vm1074, %v1069
        %1079 = vst.msk [vmem:[%s245 + $0x20] sm:$0xff] %vm1074, %v1070
        %1080 = vst.msk [vmem:[%s245 + $0x28] sm:$0xff] %vm1074, %v1071
        %1081 = vst.msk [vmem:[%s245 + $0x30] sm:$0xff] %vm1074, %v1072
        %1082 = vst.msk [vmem:[%s245 + $0x38] sm:$0xff] %vm1074, %v1073
        %s1083 = sand.u32 %s139, 1
        %s1084 = scalar_lea.sflag [#allocation4], %s1083
        %s1085 = sand.u32 %s139, 1
        %s1086 = smul.addr %s1085, 64
        %s1087 = scalar_lea.vmem [#allocation5], %s1086
        // Predicated region
        $region41: #{tpu_custom_call.1} parent=35 // pred_check
          %p1088 = pneg %p149
        $region42: #{tpu_custom_call.1} parent=35 // pred_check_branch
          %1090 = sbr.rel (%p1088) target = $region44
        $region43: #{tpu_custom_call.1} parent=35 // pred_region
          %s1091 = smul.u32 2, %s26
          %s1093 = ssub.s32 1024, 1024
          %1094 = vsyncadd %s1084, %s1093
          %s1095 = smul.addr %s25, 8
          %s1096 = sadd.s32 %s1091, %s1095
          %s1097 = smul.addr %s1096, 128
          %s1098 = scalar_lea.hbm %s4, %s1097
          %s1099 = sshll.u32 %s1087, 4
          %s1100 = int_to_ptr.vmem [resolvable:$true] %s1099
          %1105 = dma.vmem_to_hbm [thread:$0]  %s1100, 1024, %s1098, %s1084, 128, 128, 8
        $region44: #{tpu_custom_call.1} parent=35 // pred_fallthru
          _
      $region36: #{tpu_custom_call.1} parent=5 // pred_fallthru
        _
      %p1106 = scmp.le.s32.totalorder 2, %s16
      // Predicated region
      $region45: #{tpu_custom_call.1} parent=5 // pred_check
        %p1107 = pneg %p1106
      $region46: #{tpu_custom_call.1} parent=5 // pred_check_branch
        %1109 = sbr.rel (%p1107) target = $region48
      $region47: #{tpu_custom_call.1} parent=5 // pred_region
        %s1110 = ssub.s32 %s16, 2
        // Predicated region
        $region49: #{tpu_custom_call.1} parent=47 // pred_check
          %p1111 = pneg %p155
        $region50: #{tpu_custom_call.1} parent=47 // pred_check_branch
          %1113 = sbr.rel (%p1111) target = $region52
        $region51: #{tpu_custom_call.1} parent=47 // pred_region
          %s1114 = sand.u32 %s140, 1
          %s1115 = scalar_lea.sflag [#allocation4], %s1114
          %s1116 = sand.u32 %s140, 1
          %s1117 = smul.addr %s1116, 64
          %s1118 = scalar_lea.vmem [#allocation5], %s1117
          %1119 = dma.done %s1115, 1024
        $region52: #{tpu_custom_call.1} parent=47 // pred_fallthru
          _
      $region48: #{tpu_custom_call.1} parent=5 // pred_fallthru
        _
    $region6: #{tpu_custom_call.1} parent=1 // loop_footer
      %s20 = sadd.s32 1, %s16
    $region7: #{tpu_custom_call.1} parent=1 // loop_footer_branch
      %15 = sbr.rel target = $region3
    $region8: #{tpu_custom_call.1} parent=1 // loop_exit
      _
    %1120 = vsyncpa [#allocation3], 1
    %s1121 = scalar_lea.sflag [#allocation3], 1
    %1122 = vsyncpa %s1121, 1
    %1123 = vsyncpa [#allocation4], 1
    %s1124 = scalar_lea.sflag [#allocation4], 1
    %1125 = vsyncpa %s1124, 1

</llo_original>
